<compile_context>
chip_gen: v6e
topology: v6e:2x2x1
jax: 0.10.0
libtpu: 0.0.40
codegen_flags: <defaults>
</compile_context>

<pallas_src>
import functools

import jax
import jax.numpy as jnp
from jax.experimental import pallas as pl
from jax.experimental.pallas import tpu as pltpu


def _row_block(n, target=128):
    """Largest row block <= target that divides n and is a multiple of 8;
    falls back to the full extent (keeps every BlockSpec legal)."""
    if n <= target:
        return n
    b = (target // 8) * 8
    while b >= 8:
        if n % b == 0:
            return b
        b -= 8
    return n


def _leaky(v):
    return jnp.where(v > 0, v, 0.2 * v)   # LeakyReLU(0.2)


# --------------------------------------------------------------------------
# Kernel A (per type t): feature transform + all hoisted attention scores.
#   h  = x @ W1[t]                               (N_t, dim1)
#   sc = h @ [a1_0 | ... | a1_{T-1} | a2_t]      (N_t, T+1)   one wide MXU push
# sc[:, :T] is used when t is the DESTINATION type, sc[:, T] when t is a SOURCE.
# --------------------------------------------------------------------------
def _feat_kernel(x_ref, w_ref, rhs_ref, h_ref, sc_ref):
    h = jnp.dot(x_ref[...], w_ref[...], preferred_element_type=jnp.float32)
    h_ref[...] = h
    sc_ref[...] = jnp.dot(h, rhs_ref[...], preferred_element_type=jnp.float32)


def feature_transform(x, w1, rhs):
    n, f = x.shape
    dim1 = w1.shape[1]
    k = rhs.shape[1]
    bm = _row_block(n)
    row = lambda i: (i, 0)
    full = lambda i: (0, 0)
    return pl.pallas_call(
        _feat_kernel,
        out_shape=(jax.ShapeDtypeStruct((n, dim1), jnp.float32),
                   jax.ShapeDtypeStruct((n, k), jnp.float32)),
        grid=(n // bm,),
        in_specs=[pl.BlockSpec((bm, f), row),
                  pl.BlockSpec((f, dim1), full),
                  pl.BlockSpec((dim1, k), full)],
        out_specs=(pl.BlockSpec((bm, dim1), row),
                   pl.BlockSpec((bm, k), row)),
        compiler_params=pltpu.CompilerParams(dimension_semantics=("parallel",)),
    )(x, w1, rhs)


# --------------------------------------------------------------------------
# Shared type-level self-attention (runs on values already resident in vregs).
#   msgs : list of T (BM, F) messages
#   wf   : (F, 2)  = W_att @ [a_q | a_k]   (folded on host — exact)
#   bf   : (1, 2)  = b_att @ [a_q | a_k]
# Returns the attention-blended (BM, F).
# --------------------------------------------------------------------------
def _type_attention(msgs, wf, bf, idx):
    T = len(msgs)
    bm = msgs[0].shape[0]
    m_all = jnp.concatenate(msgs, axis=0)                                    # (T*BM, F)
    pq = jnp.dot(m_all, wf, preferred_element_type=jnp.float32) + bf         # (T*BM, 2)
    e_q = pq[idx * bm:(idx + 1) * bm, 0:1]                                   # query half
    scores = [_leaky(e_q + pq[t * bm:(t + 1) * bm, 1:2]) for t in range(T)]
    s = jnp.concatenate(scores, axis=1)                                      # (BM, T)
    s = s - jnp.max(s, axis=1, keepdims=True)
    ps = jnp.exp(s)
    w = ps * pl.reciprocal(jnp.sum(ps, axis=1, keepdims=True), approx=True)  # softmax over types
    acc = w[:, 0:1] * msgs[0]
    for t in range(1, T):
        acc = acc + w[:, t:t + 1] * msgs[t]
    return acc


# --------------------------------------------------------------------------
# Kernel B (per destination type t1): layer-1 fully fused.
#   node-level attention over every source type + type attention + ReLU,
#   and the hoisted layer-2 support = x1 @ gc2_W.
# --------------------------------------------------------------------------
def _layer1_kernel(*refs, T, gamma, idx):
    e1_ref = refs[0]
    h_refs = [refs[1 + 3 * t] for t in range(T)]
    e2_refs = [refs[2 + 3 * t] for t in range(T)]
    adj_refs = [refs[3 + 3 * t] for t in range(T)]
    wf_ref, bf_ref, w2_ref, out_ref = refs[1 + 3 * T:]

    e1 = e1_ref[...]                                         # (BM, T) hoisted dst scores
    msgs = []
    for t in range(T):                                       # T tiny & static -> unrolled
        adj = adj_refs[t][...]                               # (BM, N_t)
        e = _leaky(e1[:, t:t + 1] + e2_refs[t][...])         # (BM,1)+(1,N_t) broadcast
        e = jnp.where(adj > 0, e, jnp.float32(-9e15))        # mask non-edges
        e = e - jnp.max(e, axis=1, keepdims=True)
        p = jnp.exp(e)
        attn = p * pl.reciprocal(jnp.sum(p, axis=1, keepdims=True), approx=True)
        # gamma*attn@h + (1-gamma)*adj@h == (gamma*attn + (1-gamma)*adj) @ h : one matmul
        mix = gamma * attn + (1.0 - gamma) * adj
        msgs.append(jnp.dot(mix, h_refs[t][...], preferred_element_type=jnp.float32))

    acc = _type_attention(msgs, wf_ref[...], bf_ref[...], idx)
    x1 = jnp.maximum(acc, 0.0)                               # F.relu_; dropout(eval)=identity
    # hoisted layer-2 support (computed once per type, reused by all t1 of layer 2)
    out_ref[...] = jnp.dot(x1, w2_ref[...], preferred_element_type=jnp.float32)


def layer1_fused(e1, hs, e2_rows, adjs, wf, bf, w2, gamma, idx):
    T = len(hs)
    n = e1.shape[0]
    dim2 = w2.shape[1]
    bm = _row_block(n)
    row = lambda i: (i, 0)
    full = lambda i: (0, 0)

    in_specs = [pl.BlockSpec((bm, T), row)]
    args = [e1]
    for t in range(T):
        nt, dim1 = hs[t].shape
        in_specs += [pl.BlockSpec((nt, dim1), full),
                     pl.BlockSpec((1, nt), full),
                     pl.BlockSpec((bm, nt), row)]
        args += [hs[t], e2_rows[t], adjs[t]]
    in_specs += [pl.BlockSpec(wf.shape, full),
                 pl.BlockSpec(bf.shape, full),
                 pl.BlockSpec(w2.shape, full)]
    args += [wf, bf, w2]

    kern = functools.partial(_layer1_kernel, T=T, gamma=float(gamma), idx=int(idx))
    return pl.pallas_call(
        kern,
        out_shape=jax.ShapeDtypeStruct((n, dim2), jnp.float32),
        grid=(n // bm,),
        in_specs=in_specs,
        out_specs=pl.BlockSpec((bm, dim2), row),
        compiler_params=pltpu.CompilerParams(dimension_semantics=("parallel",)),
    )(*args)


# --------------------------------------------------------------------------
# Kernel C (per destination type t1): layer-2 fully fused.
#   GCN aggregation (adj @ support + b) over every source type + type attention
#   + fused log_softmax over the class axis.
# --------------------------------------------------------------------------
def _layer2_kernel(*refs, T, idx):
    sup_refs = [refs[2 * t] for t in range(T)]
    adj_refs = [refs[2 * t + 1] for t in range(T)]
    b2_ref, wf_ref, bf_ref, out_ref = refs[2 * T:]

    b2 = b2_ref[...]
    msgs = [jnp.dot(adj_refs[t][...], sup_refs[t][...],
                    preferred_element_type=jnp.float32) + b2
            for t in range(T)]                                # GCN: adj @ (x1 @ W2) + b

    acc = _type_attention(msgs, wf_ref[...], bf_ref[...], idx)
    # fused log_softmax (kept exact: no approx reciprocal here)
    z = acc - jnp.max(acc, axis=1, keepdims=True)
    lse = jnp.log(jnp.sum(jnp.exp(z), axis=1, keepdims=True))
    out_ref[...] = z - lse


def layer2_fused(supports, adjs, b2, wf, bf, idx):
    T = len(supports)
    n = adjs[0].shape[0]
    dim2 = supports[0].shape[1]
    bm = _row_block(n)
    row = lambda i: (i, 0)
    full = lambda i: (0, 0)

    in_specs = []
    args = []
    for t in range(T):
        nt = supports[t].shape[0]
        in_specs += [pl.BlockSpec((nt, dim2), full),
                     pl.BlockSpec((bm, nt), row)]
        args += [supports[t], adjs[t]]
    in_specs += [pl.BlockSpec(b2.shape, full),
                 pl.BlockSpec(wf.shape, full),
                 pl.BlockSpec(bf.shape, full)]
    args += [b2, wf, bf]

    kern = functools.partial(_layer2_kernel, T=T, idx=int(idx))
    return pl.pallas_call(
        kern,
        out_shape=jax.ShapeDtypeStruct((n, dim2), jnp.float32),
        grid=(n // bm,),
        in_specs=in_specs,
        out_specs=pl.BlockSpec((bm, dim2), row),
        compiler_params=pltpu.CompilerParams(dimension_semantics=("parallel",)),
    )(*args)


# --------------------------------------------------------------------------
# Parameter construction (deterministic, synthetic)
# --------------------------------------------------------------------------
def init_params(key, nfeat_list, nhid, nclass, att_hidden=50, orphan=True, gamma=0.1):
    ntype = len(nfeat_list)
    dim1 = nhid
    dim2 = nclass + (ntype - 1 if orphan else 0)
    keys = iter(jax.random.split(key, 8 * ntype + 8))

    def nrm(shape, scale=0.1):
        return (scale * jax.random.normal(next(keys), shape)).astype(jnp.float32)

    return {
        "gamma": float(gamma),
        "dim1": dim1,
        "dim2": dim2,
        "att_hidden": att_hidden,
        # GraphAttentionConvolution (gc1)
        "gc1_W": [nrm((nfeat_list[t], dim1)) for t in range(ntype)],
        "att_a1": [nrm((dim1, 1)) for _ in range(ntype)],
        "att_a2": [nrm((dim1, 1)) for _ in range(ntype)],
        # type-level attention after layer 1
        "at1_W": [nrm((dim1, att_hidden)) for _ in range(ntype)],
        "at1_b": [nrm((1, att_hidden)) for _ in range(ntype)],
        "at1_a": [nrm((2 * att_hidden, 1)) for _ in range(ntype)],
        # GraphConvolution (gc2, shared across types)
        "gc2_W": nrm((dim1, dim2)),
        "gc2_b": nrm((1, dim2)),
        # type-level attention after layer 2
        "at2_W": [nrm((dim2, att_hidden)) for _ in range(ntype)],
        "at2_b": [nrm((1, att_hidden)) for _ in range(ntype)],
        "at2_a": [nrm((2 * att_hidden, 1)) for _ in range(ntype)],
    }


def _fold_type_attention(W, b, a, H):
    """Fold the linear projection and score vectors of SelfAttention:
       (m @ W + b) @ [a_q | a_k]  ==  m @ (W @ A) + (b @ A)  with A = [a[:H] | a[H:]].
       Exact (LeakyReLU is applied after the score sum)."""
    aqk = jnp.concatenate([a[:H], a[H:]], axis=1)     # (H, 2)
    return W @ aqk, b @ aqk                           # (F, 2), (1, 2)


# --------------------------------------------------------------------------
# HGAT forward (node_attention=True, type_attention=True, inference)
# 9 pallas_calls total: 3 feature/score kernels + 3 fused layer-1 + 3 fused layer-2.
# --------------------------------------------------------------------------
def hgat_forward(params, x_list, adj_list):
    ntype = len(x_list)
    T = ntype
    gamma = params["gamma"]
    H = params["att_hidden"]

    # hoisted node-attention score columns (one wide RHS instead of 1-lane dots)
    A1 = jnp.concatenate(params["att_a1"], axis=1)                      # (dim1, T)

    hs, e1_all, e2_rows = [], [], []
    for t in range(ntype):
        rhs = jnp.concatenate([A1, params["att_a2"][t]], axis=1)        # (dim1, T+1)
        h, sc = feature_transform(x_list[t], params["gc1_W"][t], rhs)
        hs.append(h)
        e1_all.append(sc[:, :T])                                        # dst-side scores
        e2_rows.append(sc[:, T:T + 1].T)                                # src-side scores (1, N_t)

    # layer 1 (fused) -> directly emits support[t1] = relu(type_attn(node_attn)) @ gc2_W
    supports = []
    for t1 in range(ntype):
        wf, bf = _fold_type_attention(params["at1_W"][t1], params["at1_b"][t1],
                                      params["at1_a"][t1], H)
        supports.append(
            layer1_fused(e1_all[t1], hs, e2_rows, adj_list[t1],
                         wf, bf, params["gc2_W"], gamma, t1))

    # layer 2 (fused, incl. log_softmax)
    outs = []
    for t1 in range(ntype):
        wf, bf = _fold_type_attention(params["at2_W"][t1], params["at2_b"][t1],
                                      params["at2_a"][t1], H)
        outs.append(
            layer2_fused(supports, adj_list[t1], params["gc2_b"], wf, bf, t1))
    return outs


# --------------------------------------------------------------------------
# Pure-JAX reference (same math, un-fused, un-folded) for validation.
# --------------------------------------------------------------------------
def reference_forward(params, x_list, adj_list):
    T = len(x_list)
    gamma = params["gamma"]
    H = params["att_hidden"]

    def type_att(msgs, W, b, a, idx):
        proj = [m @ W + b for m in msgs]
        e_q = proj[idx] @ a[:H]
        s = jnp.concatenate([_leaky(e_q + p @ a[H:]) for p in proj], axis=1)
        w = jax.nn.softmax(s, axis=1)
        return sum(w[:, t:t + 1] * msgs[t] for t in range(T))

    h = [x_list[t] @ params["gc1_W"][t] for t in range(T)]
    x1 = []
    for t1 in range(T):
        msgs = []
        for t2 in range(T):
            adj = adj_list[t1][t2]
            e = _leaky(h[t1] @ params["att_a1"][t2] + (h[t2] @ params["att_a2"][t2]).T)
            e = jnp.where(adj > 0, e, -9e15)
            attn = jax.nn.softmax(e, axis=1)
            msgs.append(gamma * attn @ h[t2] + (1.0 - gamma) * adj @ h[t2])
        out = type_att(msgs, params["at1_W"][t1], params["at1_b"][t1],
                       params["at1_a"][t1], t1)
        x1.append(jnp.maximum(out, 0.0))
    outs = []
    for t1 in range(T):
        msgs = [adj_list[t1][t2] @ (x1[t2] @ params["gc2_W"]) + params["gc2_b"]
                for t2 in range(T)]
        out = type_att(msgs, params["at2_W"][t1], params["at2_b"][t1],
                       params["at2_a"][t1], t1)
        outs.append(jax.nn.log_softmax(out, axis=1))
    return outs


# --------------------------------------------------------------------------
if __name__ == "__main__":
    key = jax.random.PRNGKey(0)

    # Small synthetic heterogeneous graph: 3 node types.
    nfeat_list = [32, 24, 16]      # per-type input feature dims
    n_nodes = [16, 24, 8]          # per-type node counts
    nhid = 32
    nclass = 4
    ntype = len(nfeat_list)

    k_feat, k_adj, k_par = jax.random.split(key, 3)

    fkeys = jax.random.split(k_feat, ntype)
    x_list = [jax.random.normal(fkeys[t], (n_nodes[t], nfeat_list[t]), jnp.float32)
              for t in range(ntype)]

    # dense row-normalized adjacency adj_list[t1][t2] : (N_t1, N_t2)
    akeys = jax.random.split(k_adj, ntype * ntype)
    adj_list = []
    ki = 0
    for t1 in range(ntype):
        row = []
        for t2 in range(ntype):
            a = (jax.random.uniform(akeys[ki], (n_nodes[t1], n_nodes[t2])) < 0.6
                 ).astype(jnp.float32)
            ki += 1
            rowsum = jnp.maximum(jnp.sum(a, axis=1, keepdims=True), 1e-9)
            row.append(a / rowsum)
        adj_list.append(row)

    params = init_params(k_par, nfeat_list, nhid, nclass,
                         att_hidden=50, orphan=True, gamma=0.1)

    outs = hgat_forward(params, x_list, adj_list)
    outs = [jax.block_until_ready(o) for o in outs]
    refs = reference_forward(params, x_list, adj_list)

    dim2 = params["dim2"]
    for t in range(ntype):
        assert outs[t].shape == (n_nodes[t], dim2), outs[t].shape
        assert bool(jnp.all(jnp.isfinite(outs[t])))
        # rows of log_softmax must exp-sum to 1
        s = jnp.sum(jnp.exp(outs[t]), axis=1)
        assert bool(jnp.allclose(s, 1.0, atol=1e-4))
        # fused kernels match the un-fused pure-JAX reference
        assert bool(jnp.allclose(outs[t], refs[t], atol=3e-2)), \
            float(jnp.max(jnp.abs(outs[t] - refs[t])))

    print("KERNEL_OK")
</pallas_src>

<mosaic_0001>
module attributes {stable_mosaic.version = 11 : i64} {
  func.func @_feat_kernel(%arg0: i32, %arg1: memref<16x32xf32, #tpu.memory_space<vmem>>, %arg2: memref<32x32xf32, #tpu.memory_space<vmem>>, %arg3: memref<32x4xf32, #tpu.memory_space<vmem>>, %arg4: memref<16x32xf32, #tpu.memory_space<vmem>>, %arg5: memref<16x4xf32, #tpu.memory_space<vmem>>) attributes {dimension_semantics = [#tpu.dimension_semantics<parallel>], iteration_bounds = array<i64: 1>, scalar_prefetch = 0 : i64, scratch_operands = 0 : i64, tpu.core_type = #tpu.core_type<tc>, window_params = [{transform_indices = @transform_0, window_bounds = array<i64: 16, 32>}, {pipeline_mode = #tpu.pipeline_mode<synchronous>, transform_indices = @transform_1, window_bounds = array<i64: 32, 32>}, {pipeline_mode = #tpu.pipeline_mode<synchronous>, transform_indices = @transform_2, window_bounds = array<i64: 32, 4>}, {transform_indices = @transform_3, window_bounds = array<i64: 16, 32>}, {transform_indices = @transform_4, window_bounds = array<i64: 16, 4>}]} {
    %c0 = arith.constant 0 : index
    %c0_0 = arith.constant 0 : index
    %0 = vector.load %arg1[%c0, %c0_0] : memref<16x32xf32, #tpu.memory_space<vmem>>, vector<16x32xf32>
    %c0_1 = arith.constant 0 : index
    %c0_2 = arith.constant 0 : index
    %1 = vector.load %arg2[%c0_1, %c0_2] : memref<32x32xf32, #tpu.memory_space<vmem>>, vector<32x32xf32>
    %cst = arith.constant dense<0.000000e+00> : vector<16x32xf32>
    %2 = tpu.matmul %0, %1, %cst {dimension_numbers = #tpu.dot_dimension_numbers<[1], [0], [0], [1], [0, 0, 1, 1], [], []>} : vector<16x32xf32>, vector<32x32xf32>, vector<16x32xf32> -> vector<16x32xf32>
    %c0_3 = arith.constant 0 : index
    %c0_4 = arith.constant 0 : index
    %3 = vector.load %arg4[%c0_3, %c0_4] : memref<16x32xf32, #tpu.memory_space<vmem>>, vector<16x32xf32>
    tpu.vector_store %arg4[%c0_3, %c0_4], %2 {strides = array<i32>} : memref<16x32xf32, #tpu.memory_space<vmem>>, vector<16x32xf32>,
    %c0_5 = arith.constant 0 : index
    %c0_6 = arith.constant 0 : index
    %4 = vector.load %arg3[%c0_5, %c0_6] : memref<32x4xf32, #tpu.memory_space<vmem>>, vector<32x4xf32>
    %cst_7 = arith.constant dense<0.000000e+00> : vector<16x4xf32>
    %5 = tpu.matmul %2, %4, %cst_7 {dimension_numbers = #tpu.dot_dimension_numbers<[1], [0], [0], [1], [0, 0, 1, 1], [], []>} : vector<16x32xf32>, vector<32x4xf32>, vector<16x4xf32> -> vector<16x4xf32>
    %c0_8 = arith.constant 0 : index
    %c0_9 = arith.constant 0 : index
    %6 = vector.load %arg5[%c0_8, %c0_9] : memref<16x4xf32, #tpu.memory_space<vmem>>, vector<16x4xf32>
    tpu.vector_store %arg5[%c0_8, %c0_9], %5 {strides = array<i32>} : memref<16x4xf32, #tpu.memory_space<vmem>>, vector<16x4xf32>,
    return
  }
  func.func @transform_0(%arg0: i32) -> (i32, i32) {
    %c0_i32 = arith.constant 0 : i32
    %c0_i32_0 = arith.constant 0 : i32
    return %arg0, %c0_i32 : i32, i32
  }
  func.func @transform_1(%arg0: i32) -> (i32, i32) {
    %c0_i32 = arith.constant 0 : i32
    %c0_i32_0 = arith.constant 0 : i32
    %c0_i32_1 = arith.constant 0 : i32
    return %c0_i32, %c0_i32_0 : i32, i32
  }
  func.func @transform_2(%arg0: i32) -> (i32, i32) {
    %c0_i32 = arith.constant 0 : i32
    %c0_i32_0 = arith.constant 0 : i32
    %c0_i32_1 = arith.constant 0 : i32
    return %c0_i32, %c0_i32_0 : i32, i32
  }
  func.func @transform_3(%arg0: i32) -> (i32, i32) {
    %c0_i32 = arith.constant 0 : i32
    %c0_i32_0 = arith.constant 0 : i32
    return %arg0, %c0_i32 : i32, i32
  }
  func.func @transform_4(%arg0: i32) -> (i32, i32) {
    %c0_i32 = arith.constant 0 : i32
    %c0_i32_0 = arith.constant 0 : i32
    return %arg0, %c0_i32 : i32, i32
  }
}

</mosaic_0001>

<llo_original>
// kernel: tpu_custom_call.1
$region0: #{tpu_custom_call.1}
  #allocation0 [shape = 'u32[]', space=smem, size = 0x4, offset = 0x4, fixed_abs, tag = 'smem constant byte address 0x4 - core index']
  #allocation1 [shape = 'u32[144,128]{1,0:T(1,128)}', space=vmem, size = 0x12000, scoped, tag = 'internal scratch']
  %s0 = inlined_call_operand.hbm [shape: f32[16,32], index: 0, kind: input, shape index: {}]
  %s1 = inlined_call_operand.vmem [shape: f32[32,32], index: 1, kind: input, shape index: {}]
  %s2 = inlined_call_operand.vmem [shape: f32[32,4], index: 2, kind: input, shape index: {}]
  %s3 = inlined_call_operand.hbm [shape: f32[16,32], index: 3, kind: output, shape index: {0}]
  %s4 = inlined_call_operand.vmem [shape: f32[16,4], index: 4, kind: output, shape index: {1}]
  %5 = xla_tuple %s3, %s4
  %s6 = sld [smem:[#allocation0]]
  $region34: #{tpu_custom_call.1} parent=0
    _
  %s8 = ssub.s32 1, %s6
  %s9 = scalar_select 0, %s8, %s6
  $region1: #{tpu_custom_call.1} parent=0
    #allocation2 [shape = 'u8[8192]{0}', space=vmem, size = 0x2000, scoped, tag = 'input window, operand 0, single buffered']
    #allocation3 [shape = 's32[1]{0}', space=sflag, size = 0x4, scoped, tag = 'scoped memory for tpu_custom_call.1']
    #allocation4 [shape = 's32[1]{0}', space=sflag, size = 0x4, scoped, tag = 'scoped memory for tpu_custom_call.1']
    #allocation5 [shape = 'u8[8192]{0}', space=vmem, size = 0x2000, scoped, tag = 'output window, operand 0, single buffered']
    %10 = vsyncpa [#allocation3], 0
    %11 = vsyncpa [#allocation4], 0
    // Predicated region
    $region2: #{tpu_custom_call.1} parent=1 // pred_check
      _
    $region3: #{tpu_custom_call.1} parent=1 // pred_check_branch
      %13 = sbr.rel (0) target = $region5
    $region4: #{tpu_custom_call.1} parent=1 // pred_region
      %s15 = ssub.s32 256, 256
      %16 = vsyncadd [#allocation3], %s15
      %s17 = sshll.u32 [#allocation2], 4
      %s18 = int_to_ptr.vmem [resolvable:$true] %s17
      %23 = dma.hbm_to_vmem [thread:$0]  %s0, 256, %s18, [#allocation3], 128, 128, 8
    $region5: #{tpu_custom_call.1} parent=1 // pred_fallthru
      _
    // Predicated region
    $region6: #{tpu_custom_call.1} parent=1 // pred_check
      _
    $region7: #{tpu_custom_call.1} parent=1 // pred_check_branch
      %25 = sbr.rel (0) target = $region9
    $region8: #{tpu_custom_call.1} parent=1 // pred_region
      _
    $region9: #{tpu_custom_call.1} parent=1 // pred_fallthru
      _
    // Predicated region
    $region10: #{tpu_custom_call.1} parent=1 // pred_check
      _
    $region11: #{tpu_custom_call.1} parent=1 // pred_check_branch
      %27 = sbr.rel (0) target = $region13
    $region12: #{tpu_custom_call.1} parent=1 // pred_region
      _
    $region13: #{tpu_custom_call.1} parent=1 // pred_fallthru
      _
    // Predicated region
    $region14: #{tpu_custom_call.1} parent=1 // pred_check
      _
    $region15: #{tpu_custom_call.1} parent=1 // pred_check_branch
      %29 = sbr.rel (0) target = $region17
    $region16: #{tpu_custom_call.1} parent=1 // pred_region
      %30 = dma.done [#allocation3], 256
    $region17: #{tpu_custom_call.1} parent=1 // pred_fallthru
      _
    %v31 = vld [vmem:[#allocation2] sm:$0xff]
    %v32 = vld [vmem:[#allocation2 + $0x8] sm:$0xff]
    %v33 = vld [vmem:[%s1] sm:$0xff]
    %v34 = vld [vmem:[%s1 + $0x8] sm:$0xff]
    %v35 = vld [vmem:[%s1 + $0x10] sm:$0xff]
    %v36 = vld [vmem:[%s1 + $0x18] sm:$0xff]
    %vm37 = vcmask 261120
    %v39 = vsel %vm37, %v31, 0
    %v42 = vsel %vm37, %v32, 0
    %44 = vmatprep.subr.mxu0 0.0
    %45 = vmatpush1.msra.mxu0 0.0
    %46 = vmatprep.subr.mxu0 0.0
    %47 = vmatpush1.msra.mxu0 0.0
    %48 = vmatprep.subr.mxu0 0.0
    %49 = vmatpush1.msra.mxu0 0.0
    %50 = vmatprep.subr.mxu0 0.0
    %51 = vmatpush1.msra.mxu0 0.0
    %52 = vmatprep.subr.mxu0 0.0
    %53 = vmatpush1.msra.mxu0 0.0
    %54 = vmatprep.subr.mxu0 0.0
    %55 = vmatpush1.msra.mxu0 0.0
    %56 = vmatprep.subr.mxu0 0.0
    %57 = vmatpush1.msra.mxu0 0.0
    %58 = vmatprep.subr.mxu0 0.0
    %59 = vmatpush1.msra.mxu0 0.0
    %60 = vmatprep.subr.mxu0 0.0
    %61 = vmatpush1.msra.mxu0 0.0
    %62 = vmatprep.subr.mxu0 0.0
    %63 = vmatpush1.msra.mxu0 0.0
    %64 = vmatprep.subr.mxu0 0.0
    %65 = vmatpush1.msra.mxu0 0.0
    %66 = vmatprep.subr.mxu0 0.0
    %67 = vmatpush1.msra.mxu0 0.0
    %68 = vmatprep.subr.mxu0 0.0
    %69 = vmatpush1.msra.mxu0 %v36
    %70 = vmatprep.subr.mxu0 0.0
    %71 = vmatpush1.msra.mxu0 %v35
    %72 = vmatprep.subr.mxu0 0.0
    %73 = vmatpush1.msra.mxu0 %v34
    %74 = vmatprep.subr.mxu0 0.0
    %75 = vmatpush1.msra.mxu0 %v33
    %76 = vmatprep.subr.mxu0 0.0
    %77 = vmatpush2.msra.mxu0 0.0
    %78 = vmatprep.subr.mxu0 0.0
    %79 = vmatpush2.msra.mxu0 0.0
    %80 = vmatprep.subr.mxu0 0.0
    %81 = vmatpush2.msra.mxu0 0.0
    %82 = vmatprep.subr.mxu0 0.0
    %83 = vmatpush2.msra.mxu0 0.0
    %84 = vmatprep.subr.mxu0 0.0
    %85 = vmatpush2.msra.mxu0 0.0
    %86 = vmatprep.subr.mxu0 0.0
    %87 = vmatpush2.msra.mxu0 0.0
    %88 = vmatprep.subr.mxu0 0.0
    %89 = vmatpush2.msra.mxu0 0.0
    %90 = vmatprep.subr.mxu0 0.0
    %91 = vmatpush2.msra.mxu0 0.0
    %92 = vmatprep.subr.mxu0 0.0
    %93 = vmatpush2.msra.mxu0 0.0
    %94 = vmatprep.subr.mxu0 0.0
    %95 = vmatpush2.msra.mxu0 0.0
    %96 = vmatprep.subr.mxu0 0.0
    %97 = vmatpush2.msra.mxu0 0.0
    %98 = vmatprep.subr.mxu0 0.0
    %99 = vmatpush2.msra.mxu0 0.0
    %100 = vmatprep.subr.mxu0 0.0
    %101 = vmatpush2.msra.mxu0 0.0
    %102 = vmatprep.subr.mxu0 0.0
    %103 = vmatpush2.msra.mxu0 0.0
    %104 = vmatprep.subr.mxu0 0.0
    %105 = vmatpush2.msra.mxu0 0.0
    %106 = vmatprep.subr.mxu0 0.0
    %107 = vmatpush2.msra.mxu0 0.0
    %108 = vmatprep.mubr.f32.mxu0 0.0
    %109 = vmatmul.mubr.f32.gmra.mxu0 %v39
    %v110 = vpop.f32.mrf.mxu0
    %v111 = vadd.f32 0.0, %v110
    %v112 = vpop.f32.mrf.mxu0
    %113 = vmatprep.mubr.f32.mxu0 0.0
    %114 = vmatmul.mubr.f32.gmra.mxu0 %v42
    %v115 = vpop.f32.mrf.mxu0
    %v116 = vadd.f32 0.0, %v115
    %v117 = vpop.f32.mrf.mxu0
    %118 = vdwg.mxu0
    %119 = vst.msk [vmem:[#allocation5] sm:$0xff] %vm37, %v111
    %120 = vst.msk [vmem:[#allocation5 + $0x8] sm:$0xff] %vm37, %v116
    %v121 = vld [vmem:[%s2] sm:$0xff]
    %v122 = vld [vmem:[%s2 + $0x8] sm:$0xff]
    %v123 = vld [vmem:[%s2 + $0x10] sm:$0xff]
    %v124 = vld [vmem:[%s2 + $0x18] sm:$0xff]
    %v126 = vsel %vm37, %v111, 0
    %v129 = vsel %vm37, %v116, 0
    %131 = vmatprep.subr.mxu0 0.0
    %132 = vmatpush1.msra.mxu0 0.0
    %133 = vmatprep.subr.mxu0 0.0
    %134 = vmatpush1.msra.mxu0 0.0
    %135 = vmatprep.subr.mxu0 0.0
    %136 = vmatpush1.msra.mxu0 0.0
    %137 = vmatprep.subr.mxu0 0.0
    %138 = vmatpush1.msra.mxu0 0.0
    %139 = vmatprep.subr.mxu0 0.0
    %140 = vmatpush1.msra.mxu0 0.0
    %141 = vmatprep.subr.mxu0 0.0
    %142 = vmatpush1.msra.mxu0 0.0
    %143 = vmatprep.subr.mxu0 0.0
    %144 = vmatpush1.msra.mxu0 0.0
    %145 = vmatprep.subr.mxu0 0.0
    %146 = vmatpush1.msra.mxu0 0.0
    %147 = vmatprep.subr.mxu0 0.0
    %148 = vmatpush1.msra.mxu0 0.0
    %149 = vmatprep.subr.mxu0 0.0
    %150 = vmatpush1.msra.mxu0 0.0
    %151 = vmatprep.subr.mxu0 0.0
    %152 = vmatpush1.msra.mxu0 0.0
    %153 = vmatprep.subr.mxu0 0.0
    %154 = vmatpush1.msra.mxu0 0.0
    %155 = vmatprep.subr.mxu0 0.0
    %156 = vmatpush1.msra.mxu0 %v124
    %157 = vmatprep.subr.mxu0 0.0
    %158 = vmatpush1.msra.mxu0 %v123
    %159 = vmatprep.subr.mxu0 0.0
    %160 = vmatpush1.msra.mxu0 %v122
    %161 = vmatprep.subr.mxu0 0.0
    %162 = vmatpush1.msra.mxu0 %v121
    %163 = vmatprep.subr.mxu0 0.0
    %164 = vmatpush2.msra.mxu0 0.0
    %165 = vmatprep.subr.mxu0 0.0
    %166 = vmatpush2.msra.mxu0 0.0
    %167 = vmatprep.subr.mxu0 0.0
    %168 = vmatpush2.msra.mxu0 0.0
    %169 = vmatprep.subr.mxu0 0.0
    %170 = vmatpush2.msra.mxu0 0.0
    %171 = vmatprep.subr.mxu0 0.0
    %172 = vmatpush2.msra.mxu0 0.0
    %173 = vmatprep.subr.mxu0 0.0
    %174 = vmatpush2.msra.mxu0 0.0
    %175 = vmatprep.subr.mxu0 0.0
    %176 = vmatpush2.msra.mxu0 0.0
    %177 = vmatprep.subr.mxu0 0.0
    %178 = vmatpush2.msra.mxu0 0.0
    %179 = vmatprep.subr.mxu0 0.0
    %180 = vmatpush2.msra.mxu0 0.0
    %181 = vmatprep.subr.mxu0 0.0
    %182 = vmatpush2.msra.mxu0 0.0
    %183 = vmatprep.subr.mxu0 0.0
    %184 = vmatpush2.msra.mxu0 0.0
    %185 = vmatprep.subr.mxu0 0.0
    %186 = vmatpush2.msra.mxu0 0.0
    %187 = vmatprep.subr.mxu0 0.0
    %188 = vmatpush2.msra.mxu0 0.0
    %189 = vmatprep.subr.mxu0 0.0
    %190 = vmatpush2.msra.mxu0 0.0
    %191 = vmatprep.subr.mxu0 0.0
    %192 = vmatpush2.msra.mxu0 0.0
    %193 = vmatprep.subr.mxu0 0.0
    %194 = vmatpush2.msra.mxu0 0.0
    %195 = vmatprep.mubr.f32.mxu0 0.0
    %196 = vmatmul.mubr.f32.gmra.mxu0 %v126
    %v197 = vpop.f32.mrf.mxu0
    %v198 = vadd.f32 0.0, %v197
    %v199 = vpop.f32.mrf.mxu0
    %200 = vmatprep.mubr.f32.mxu0 0.0
    %201 = vmatmul.mubr.f32.gmra.mxu0 %v129
    %v202 = vpop.f32.mrf.mxu0
    %v203 = vadd.f32 0.0, %v202
    %v204 = vpop.f32.mrf.mxu0
    %205 = vdwg.mxu0
    %vm206 = vcmask 31744
    %207 = vst.msk [vmem:[%s4] sm:$0xff] %vm206, %v198
    %208 = vst.msk [vmem:[%s4 + $0x8] sm:$0xff] %vm206, %v203
    // Predicated region
    $region18: #{tpu_custom_call.1} parent=1 // pred_check
      _
    $region19: #{tpu_custom_call.1} parent=1 // pred_check_branch
      %210 = sbr.rel (0) target = $region21
    $region20: #{tpu_custom_call.1} parent=1 // pred_region
      %s212 = ssub.s32 256, 256
      %213 = vsyncadd [#allocation4], %s212
      %s214 = sshll.u32 [#allocation5], 4
      %s215 = int_to_ptr.vmem [resolvable:$true] %s214
      %220 = dma.vmem_to_hbm [thread:$0]  %s215, 256, %s3, [#allocation4], 128, 128, 8
    $region21: #{tpu_custom_call.1} parent=1 // pred_fallthru
      _
    // Predicated region
    $region22: #{tpu_custom_call.1} parent=1 // pred_check
      _
    $region23: #{tpu_custom_call.1} parent=1 // pred_check_branch
      %222 = sbr.rel (0) target = $region25
    $region24: #{tpu_custom_call.1} parent=1 // pred_region
      _
    $region25: #{tpu_custom_call.1} parent=1 // pred_fallthru
      _
    // Predicated region
    $region26: #{tpu_custom_call.1} parent=1 // pred_check
      _
    $region27: #{tpu_custom_call.1} parent=1 // pred_check_branch
      %224 = sbr.rel (0) target = $region29
    $region28: #{tpu_custom_call.1} parent=1 // pred_region
      %225 = dma.done [#allocation4], 256
    $region29: #{tpu_custom_call.1} parent=1 // pred_fallthru
      _
    // Predicated region
    $region30: #{tpu_custom_call.1} parent=1 // pred_check
      _
    $region31: #{tpu_custom_call.1} parent=1 // pred_check_branch
      %227 = sbr.rel (0) target = $region33
    $region32: #{tpu_custom_call.1} parent=1 // pred_region
      _
    $region33: #{tpu_custom_call.1} parent=1 // pred_fallthru
      _
    %228 = vsyncpa [#allocation3], 1
    %229 = vsyncpa [#allocation4], 1

</llo_original>
